<compile_context>
chip_gen: v6e
topology: v6e:2x2x1
jax: 0.10.0
libtpu: 0.0.40
codegen_flags: <defaults>
</compile_context>

<pallas_src>
import functools

import jax
import jax.numpy as jnp
import numpy as np
from jax import lax
from jax.experimental import pallas as pl
from jax.experimental.pallas import tpu as pltpu

NEG_SLOPE = 0.01          # torch.nn.LeakyReLU default negative_slope
LANE = 128
SUBLANE = 8
MAX_ROW_TILE = 32
MAX_GEN_TILE_LANES = 64   # weight-gen lane tile cap = 64 * 128 = 8192 lanes


def _round_up(v, m):
    return (v + m - 1) // m * m


def _pick_row_tile(ho):
    """Largest row tile (8..32, multiple of 8) balancing padding waste against
    the ~0.35us per-grid-step overhead (modeled as ~3 rows of work)."""
    best_t, best_cost = SUBLANE, None
    for t in range(SUBLANE, MAX_ROW_TILE + 1, SUBLANE):
        ho_pad = _round_up(ho, t)
        cost = ho_pad + 3 * (ho_pad // t)
        if best_cost is None or cost < best_cost:
            best_t, best_cost = t, cost
    return best_t


def _leaky_relu(v):
    return jnp.where(v > 0, v, NEG_SLOPE * v)


# ---------------------------------------------------------------------------
# Kernel A (fused): manifold MLP + per-sample filter generation (+ bias head).
# Grid tiles the flat (Kh * OCp * Kw * IC) tap axis in 128-multiple lane blocks.
# m2 is tiny (B x MC) and recomputed per tile -> no extra launch, no HBM m2.
# ---------------------------------------------------------------------------
def _mlp_core(qf_ref, a1_ref, b1_ref, a2_ref, b2_ref):
    # m1 = LeakyReLU(q_flat @ A1 + b1)   -- Conv2d(1, MC, 8) on the 8x8 q
    m1 = jnp.dot(qf_ref[...], a1_ref[...],
                 preferred_element_type=jnp.float32) + b1_ref[...]
    m1 = _leaky_relu(m1)
    # m2 = LeakyReLU(m1 @ A2 + b2)       -- Conv2d(MC, MC, 1)
    m2 = jnp.dot(m1, a2_ref[...],
                 preferred_element_type=jnp.float32) + b2_ref[...]
    return _leaky_relu(m2)


def _gen_bias_kernel(qf_ref, a1_ref, b1_ref, a2_ref, b2_ref, ab_ref, bb_ref,
                     at_ref, bt_ref, w_ref, bias_ref):
    m2 = _mlp_core(qf_ref, a1_ref, b1_ref, a2_ref, b2_ref)        # (B, MC) f32
    # bias = m2 @ Ab + bb                -- Conv2d(MC, OC, 1), OC padded to 8
    bias_ref[...] = jnp.dot(m2, ab_ref[...],
                            preferred_element_type=jnp.float32) + bb_ref[...]
    # w tile = m2 @ At + bt              -- ConvTranspose2d taps (bf16 operands)
    w_ref[...] = (jnp.dot(m2.astype(at_ref.dtype), at_ref[...],
                          preferred_element_type=jnp.float32)
                  + bt_ref[...]).astype(w_ref.dtype)


def _gen_kernel(qf_ref, a1_ref, b1_ref, a2_ref, b2_ref, at_ref, bt_ref, w_ref):
    m2 = _mlp_core(qf_ref, a1_ref, b1_ref, a2_ref, b2_ref)
    w_ref[...] = (jnp.dot(m2.astype(at_ref.dtype), at_ref[...],
                          preferred_element_type=jnp.float32)
                  + bt_ref[...]).astype(w_ref.dtype)


# ---------------------------------------------------------------------------
# Kernel B: grouped (groups=batch) conv, fused directly over x (no HBM im2col).
#   w_ref: (K, OCp, K*IC)           bf16  taps, order (kh | oc | kw, ic)
#   x_ref: (Hp2, IC, Wp2)           bf16  zero-padded input, rows major
#   b_ref: (OCp, 1)                 f32
#   o_ref: (row_tile, OCp, Wo_pad)  bf16  one tile of output rows (lane-dense)
# ---------------------------------------------------------------------------
def _conv_kernel(w_ref, x_ref, b_ref, o_ref, *, K, dilation, row_tile, fuse_kw):
    r0 = pl.program_id(1) * row_tile               # first output row of tile
    oc_pad = o_ref.shape[1]
    wo_pad = o_ref.shape[2]
    ic = x_ref.shape[1]
    d = dilation

    # Hoisted once per grid step (JAX does not CSE broadcast_in_dim).
    bias_bc = jnp.broadcast_to(b_ref[...], (oc_pad, wo_pad))      # f32
    w_kh = [w_ref[kh] for kh in range(K)]                         # (OCp, K*IC)
    if not fuse_kw:
        w_tap = [[w_kh[kh][:, kw * ic:(kw + 1) * ic] for kw in range(K)]
                 for kh in range(K)]

    def compute_row(j):
        acc = bias_bc                               # bias as accumulator init
        for kh in range(K):                         # static
            xrow = x_ref[r0 + j + kh * d]           # (IC, Wp2), loaded once
            if fuse_kw:
                # Single (OCp, K*IC) @ (K*IC, Wo_pad) MXU contraction per kh:
                # kw-shifted views are in-register lane slices of xrow.
                rhs = jnp.concatenate(
                    [xrow[:, kw * d:kw * d + wo_pad] for kw in range(K)],
                    axis=0)
                acc = acc + jnp.dot(w_kh[kh], rhs,
                                    preferred_element_type=jnp.float32)
            else:
                # IC not sublane-aligned: per-tap dots, but xrow reused.
                for kw in range(K):
                    acc = acc + jnp.dot(w_tap[kh][kw],
                                        xrow[:, kw * d:kw * d + wo_pad],
                                        preferred_element_type=jnp.float32)
        o_ref[j] = acc.astype(o_ref.dtype)          # dense, unmasked store

    if row_tile <= 16:
        for j in range(row_tile):                   # fully static (small tile)
            compute_row(j)
    else:
        def body(j, carry):
            compute_row(j)
            return carry
        lax.fori_loop(0, row_tile, body, 0, unroll=2)


class ConvolutionalFilterManifoldPallas:
    """JAX/Pallas re-implementation of the PyTorch ConvolutionalFilterManifold
    forward pass (transposed=False, stride=1 path)."""

    def __init__(self, in_channels, out_channels, kernel_size, stride=1,
                 dilation=1, padding=0, transposed=False, bias=True,
                 manifold_channels=64, manifold_bias=True, key=None):
        if transposed:
            # TODO(synk): conv_transpose2d (transposed=True) path not implemented.
            raise NotImplementedError("transposed=True path not implemented")
        self.in_channels = in_channels
        self.out_channels = out_channels
        self.kernel_size = kernel_size
        self.stride = stride
        self.dilation = dilation
        self.padding = padding
        self.manifold_channels = manifold_channels
        self.has_bias = bias

        MC, IC, OC, K = manifold_channels, in_channels, out_channels, kernel_size
        if key is None:
            key = jax.random.PRNGKey(0)
        keys = jax.random.split(key, 8)

        def u(k, shape, fan_in):
            bound = 1.0 / np.sqrt(fan_in)
            return jax.random.uniform(k, shape, jnp.float32, -bound, bound)

        # Raw parameters (PyTorch layouts), kept for the reference check.
        self.W1 = u(keys[0], (MC, 1, 8, 8), 1 * 8 * 8)        # manifold[0]
        self.b1 = u(keys[1], (MC,), 1 * 8 * 8)
        self.W2 = u(keys[2], (MC, MC, 1, 1), MC)              # manifold[2]
        self.b2 = u(keys[3], (MC,), MC)
        self.Wt = u(keys[4], (MC, OC * IC, K, K), MC * K * K)  # weight_transform
        self.bt = u(keys[5], (OC * IC,), MC * K * K)
        self.Wb = u(keys[6], (OC, MC, 1, 1), MC)              # bias_transform
        self.bb = u(keys[7], (OC,), MC)

        # ---- kernel-layout parameters (precomputed once) --------------------
        self.oc_pad = _round_up(OC, SUBLANE)                  # OC -> 8 sublanes
        OCp = self.oc_pad

        self.A1 = self.W1.reshape(MC, 64).T                   # (64, MC)
        self.b1r = self.b1.reshape(1, MC)
        self.A2 = self.W2.reshape(MC, MC).T                   # (MC, MC)
        self.b2r = self.b2.reshape(1, MC)
        self.Ab_pad = jnp.pad(self.Wb.reshape(OC, MC).T, ((0, 0), (0, OCp - OC)))
        self.bb_pad = jnp.pad(self.bb.reshape(1, OC), ((0, 0), (0, OCp - OC)))

        # weight_transform permuted to (kh | oc | kw, ic) tap order, OC padded,
        # lane-padded to a 128 multiple and stored bf16 (its HBM read dominates
        # the weight-generation kernel).
        Wt5 = self.Wt.reshape(MC, OC, IC, K, K)
        At = jnp.transpose(Wt5, (0, 3, 1, 4, 2))              # (MC, Kh, OC, Kw, IC)
        At_p = jnp.zeros((MC, K, OCp, K, IC), jnp.float32).at[:, :, :OC].set(At)
        self.N2 = K * OCp * K * IC
        self.N2_pad = _round_up(self.N2, LANE)
        self.At_pad = jnp.pad(At_p.reshape(MC, self.N2),
                              ((0, 0), (0, self.N2_pad - self.N2))
                              ).astype(jnp.bfloat16)
        bt2 = jnp.broadcast_to(self.bt.reshape(1, OC, 1, IC), (K, OC, K, IC))
        bt_p = jnp.zeros((K, OCp, K, IC), jnp.float32).at[:, :OC].set(bt2)
        self.bt_pad = jnp.pad(bt_p.reshape(1, self.N2),
                              ((0, 0), (0, self.N2_pad - self.N2)))

        # Largest 128-multiple tile (<= 8192 lanes) dividing the padded tap axis.
        max_k = max(1, min(self.N2_pad // LANE, MAX_GEN_TILE_LANES))
        k_div = next(kk for kk in range(max_k, 0, -1)
                     if self.N2_pad % (LANE * kk) == 0)
        self.w_tile = LANE * k_div

    # -------------------------------------------------------------------
    def _generate(self, q):
        """q: (B,1,8,8) -> taps (B, K, OCp, K*IC) bf16, bias (B, OCp) f32."""
        B = q.shape[0]
        MC, IC, OC, K = (self.manifold_channels, self.in_channels,
                         self.out_channels, self.kernel_size)
        OCp = self.oc_pad
        assert q.shape[1:] == (1, 8, 8), \
            "q must be (B,1,8,8) so the manifold collapses to 1x1"
        # TODO(synk): general q spatial sizes (>8) would make m spatially extended.

        qf = q.reshape(B, 64).astype(jnp.float32)
        NT = self.w_tile
        n_tiles = self.N2_pad // NT

        def full(arr):
            return pl.BlockSpec(arr.shape, lambda i: (0,) * arr.ndim)

        at_spec = pl.BlockSpec((MC, NT), lambda i: (0, i))
        bt_spec = pl.BlockSpec((1, NT), lambda i: (0, i))
        w_spec = pl.BlockSpec((B, NT), lambda i: (0, i))

        if self.has_bias:
            w_flat, bias = pl.pallas_call(
                _gen_bias_kernel,
                grid=(n_tiles,),
                in_specs=[full(qf), full(self.A1), full(self.b1r), full(self.A2),
                          full(self.b2r), full(self.Ab_pad), full(self.bb_pad),
                          at_spec, bt_spec],
                out_specs=(w_spec, pl.BlockSpec((B, OCp), lambda i: (0, 0))),
                out_shape=(jax.ShapeDtypeStruct((B, self.N2_pad), jnp.bfloat16),
                           jax.ShapeDtypeStruct((B, OCp), jnp.float32)),
                compiler_params=pltpu.CompilerParams(
                    dimension_semantics=("arbitrary",)),
            )(qf, self.A1, self.b1r, self.A2, self.b2r,
              self.Ab_pad, self.bb_pad, self.At_pad, self.bt_pad)
        else:
            w_flat = pl.pallas_call(
                _gen_kernel,
                grid=(n_tiles,),
                in_specs=[full(qf), full(self.A1), full(self.b1r), full(self.A2),
                          full(self.b2r), at_spec, bt_spec],
                out_specs=w_spec,
                out_shape=jax.ShapeDtypeStruct((B, self.N2_pad), jnp.bfloat16),
                compiler_params=pltpu.CompilerParams(
                    dimension_semantics=("arbitrary",)),
            )(qf, self.A1, self.b1r, self.A2, self.b2r,
              self.At_pad, self.bt_pad)
            bias = jnp.zeros((B, OCp), jnp.float32)

        w4 = w_flat[:, :self.N2].reshape(B, K, OCp, K * IC)
        return w4, bias

    # -------------------------------------------------------------------
    def __call__(self, q, x):
        B, IC, H, W = x.shape
        assert IC == self.in_channels
        assert q.shape[0] == B
        OC, K = self.out_channels, self.kernel_size
        OCp = self.oc_pad
        d, p, s = self.dilation, self.padding, self.stride
        if s != 1:
            # TODO(synk): stride > 1 fused conv needs strided lane loads.
            raise NotImplementedError("stride > 1 path not implemented")

        w4, bias = self._generate(q)
        bias3 = bias.reshape(B, OCp, 1)

        Ho = H + 2 * p - d * (K - 1)
        Wo = W + 2 * p - d * (K - 1)
        assert Ho > 0 and Wo > 0
        TH = _pick_row_tile(Ho)
        Ho_pad = _round_up(Ho, TH)
        Wo_pad = _round_up(Wo, LANE)            # lane-dense output stores
        Hp2 = Ho_pad + d * (K - 1)
        Wp2 = Wo_pad + d * (K - 1)

        # Zero-pad once (conv padding + alignment), keep activations in bf16,
        # and put IC next to the lane axis so each tap row is one contiguous
        # VMEM slice of the resident slab.
        xk = jnp.pad(x.astype(jnp.bfloat16),
                     ((0, 0), (0, 0), (p, Hp2 - H - p), (p, Wp2 - W - p)))
        xk = jnp.transpose(xk, (0, 2, 1, 3))    # (B, Hp2, IC, Wp2)
        # TODO(synk): on v7x, optionally store xk / w4 in fp8 for large IC.

        # ---- VMEM budgeting (generation-aware) ------------------------------
        x_slab = Hp2 * IC * Wp2 * 2
        fixed = (2 * K * OCp * (K * IC) * 2          # filter taps, 2 buffers
                 + 2 * TH * OCp * Wo_pad * 2         # output tile,  2 buffers
                 + 2 * OCp * LANE * 4                # bias (layout-padded)
                 + (2 << 20))                        # compiler scratch headroom
        try:
            vmem_cap = int(pltpu.get_tpu_info().vmem_capacity_bytes)
        except Exception:
            vmem_cap = 64 * 2 ** 20
        budget = int(vmem_cap * 0.85)
        x_buffers = 2 if fixed + 2 * x_slab <= budget else 1
        assert fixed + x_buffers * x_slab <= budget, (
            "padded input image does not fit in VMEM")
        # TODO(synk): tile the image spatially with halo DMAs for huge IC*H*W.

        x_index = lambda b, t: (b, 0, 0, 0)
        if x_buffers == 2:
            x_spec = pl.BlockSpec((None, Hp2, IC, Wp2), x_index)
        else:
            # Single-buffer the resident image (its block only changes on the
            # b axis); halves its footprint, key on v7x's 64 MiB/TC VMEM.
            x_spec = pl.BlockSpec((None, Hp2, IC, Wp2), x_index,
                                  pipeline_mode=pl.Buffered(1))

        # Megacore: split on the batch axis when possible so each core keeps a
        # single resident image; for B == 1 split on the row-tile axis instead.
        sem = ("parallel", "arbitrary") if B > 1 else ("arbitrary", "parallel")

        out_pad = pl.pallas_call(
            functools.partial(_conv_kernel, K=K, dilation=d, row_tile=TH,
                              fuse_kw=(IC % SUBLANE == 0)),
            grid=(B, Ho_pad // TH),
            in_specs=[
                pl.BlockSpec((None, K, OCp, K * IC), lambda b, t: (b, 0, 0, 0)),
                x_spec,
                pl.BlockSpec((None, OCp, 1), lambda b, t: (b, 0, 0)),
            ],
            out_specs=pl.BlockSpec((None, TH, OCp, Wo_pad),
                                   lambda b, t: (b, t, 0, 0)),
            out_shape=jax.ShapeDtypeStruct((B, Ho_pad, OCp, Wo_pad),
                                           jnp.bfloat16),
            compiler_params=pltpu.CompilerParams(
                dimension_semantics=sem, vmem_limit_bytes=budget),
        )(w4, xk, bias3)

        # Strip alignment padding and restore NCHW; XLA fuses the slice and the
        # minor-dim-preserving transpose into one copy at final (bf16) size.
        out = jnp.transpose(out_pad[:, :Ho, :OC, :Wo], (0, 2, 1, 3))
        return out.astype(x.dtype)


# ---------------------------------------------------------------------------
# Pure-JAX reference (mirrors the kernel's bf16 operand / output storage).
# ---------------------------------------------------------------------------
def _reference(mod: ConvolutionalFilterManifoldPallas, q, x):
    B = q.shape[0]
    MC, IC, OC, K = (mod.manifold_channels, mod.in_channels,
                     mod.out_channels, mod.kernel_size)
    with jax.default_matmul_precision("float32"):
        qf = q.reshape(B, 64)
        m1 = qf @ mod.W1.reshape(MC, 64).T + mod.b1
        m1 = jnp.where(m1 > 0, m1, NEG_SLOPE * m1)
        m2 = m1 @ mod.W2.reshape(MC, MC).T + mod.b2
        m2 = jnp.where(m2 > 0, m2, NEG_SLOPE * m2)
        # Mirror the kernel's bf16 storage of the weight-transform operands.
        m2q = m2.astype(jnp.bfloat16).astype(jnp.float32)
        Wt_mat = mod.Wt.reshape(MC, OC * IC * K * K)
        Wt_mat = Wt_mat.astype(jnp.bfloat16).astype(jnp.float32)
        w = (m2q @ Wt_mat).reshape(B, OC * IC, K, K) \
            + mod.bt[None, :, None, None]
        w = w.reshape(B, OC, IC, K, K)
        if mod.has_bias:
            bias = m2 @ mod.Wb.reshape(OC, MC).T + mod.bb
        else:
            bias = jnp.zeros((B, OC), jnp.float32)

    # Mirror the kernel's bf16 conv operands (f32 accumulation) + bf16 output.
    wq = w.astype(jnp.bfloat16).astype(jnp.float32)
    xq = x.astype(jnp.bfloat16).astype(jnp.float32)
    outs = []
    for b in range(B):
        o = lax.conv_general_dilated(
            xq[b:b + 1], wq[b],
            window_strides=(mod.stride, mod.stride),
            padding=[(mod.padding, mod.padding)] * 2,
            rhs_dilation=(mod.dilation, mod.dilation),
            dimension_numbers=("NCHW", "OIHW", "NCHW"),
            precision=lax.Precision.HIGHEST)
        outs.append(o + bias[b][None, :, None, None])
    ref = jnp.concatenate(outs, axis=0)
    return ref.astype(jnp.bfloat16).astype(x.dtype)


if __name__ == "__main__":
    key = jax.random.PRNGKey(0)
    k_q, k_x, k_p, k_p2 = jax.random.split(key, 4)

    B, IC, OC, K = 2, 4, 4, 3
    q = jax.random.normal(k_q, (B, 1, 8, 8), jnp.float32)
    x = jax.random.normal(k_x, (B, IC, 16, 16), jnp.float32)

    # Case 1: bias=True, padding=0, dilation=1.
    mod = ConvolutionalFilterManifoldPallas(
        in_channels=IC, out_channels=OC, kernel_size=K,
        stride=1, dilation=1, padding=0, bias=True,
        manifold_channels=64, key=k_p)
    out = jax.block_until_ready(mod(q, x))
    assert out.shape == (B, OC, 14, 14), out.shape
    ref = jax.block_until_ready(_reference(mod, q, x))
    err = float(np.max(np.abs(np.asarray(out) - np.asarray(ref))))
    assert np.allclose(np.asarray(out), np.asarray(ref),
                       atol=2e-2, rtol=2e-2), err

    # Case 2: bias=False, padding=1, dilation=2 (exercises no-bias + dilation).
    mod2 = ConvolutionalFilterManifoldPallas(
        in_channels=IC, out_channels=OC, kernel_size=K,
        stride=1, dilation=2, padding=1, bias=False,
        manifold_channels=64, key=k_p2)
    out2 = jax.block_until_ready(mod2(q, x))
    assert out2.shape == (B, OC, 14, 14), out2.shape
    ref2 = jax.block_until_ready(_reference(mod2, q, x))
    err2 = float(np.max(np.abs(np.asarray(out2) - np.asarray(ref2))))
    assert np.allclose(np.asarray(out2), np.asarray(ref2),
                       atol=2e-2, rtol=2e-2), err2

    print("KERNEL_OK")
</pallas_src>

<mosaic_0001>
module attributes {stable_mosaic.version = 11 : i64} {
  func.func @_gen_bias_kernel(%arg0: i32, %arg1: memref<2x64xf32, #tpu.memory_space<vmem>>, %arg2: memref<64x64xf32, #tpu.memory_space<vmem>>, %arg3: memref<1x64xf32, #tpu.memory_space<vmem>>, %arg4: memref<64x64xf32, #tpu.memory_space<vmem>>, %arg5: memref<1x64xf32, #tpu.memory_space<vmem>>, %arg6: memref<64x8xf32, #tpu.memory_space<vmem>>, %arg7: memref<1x8xf32, #tpu.memory_space<vmem>>, %arg8: memref<64x384xbf16, #tpu.memory_space<vmem>>, %arg9: memref<1x384xf32, #tpu.memory_space<vmem>>, %arg10: memref<2x384xbf16, #tpu.memory_space<vmem>>, %arg11: memref<2x8xf32, #tpu.memory_space<vmem>>) attributes {dimension_semantics = [#tpu.dimension_semantics<arbitrary>], iteration_bounds = array<i64: 1>, scalar_prefetch = 0 : i64, scratch_operands = 0 : i64, tpu.core_type = #tpu.core_type<tc>, window_params = [{pipeline_mode = #tpu.pipeline_mode<synchronous>, transform_indices = @transform_0, window_bounds = array<i64: 2, 64>}, {pipeline_mode = #tpu.pipeline_mode<synchronous>, transform_indices = @transform_1, window_bounds = array<i64: 64, 64>}, {pipeline_mode = #tpu.pipeline_mode<synchronous>, transform_indices = @transform_2, window_bounds = array<i64: 1, 64>}, {pipeline_mode = #tpu.pipeline_mode<synchronous>, transform_indices = @transform_3, window_bounds = array<i64: 64, 64>}, {pipeline_mode = #tpu.pipeline_mode<synchronous>, transform_indices = @transform_4, window_bounds = array<i64: 1, 64>}, {pipeline_mode = #tpu.pipeline_mode<synchronous>, transform_indices = @transform_5, window_bounds = array<i64: 64, 8>}, {pipeline_mode = #tpu.pipeline_mode<synchronous>, transform_indices = @transform_6, window_bounds = array<i64: 1, 8>}, {transform_indices = @transform_7, window_bounds = array<i64: 64, 384>}, {transform_indices = @transform_8, window_bounds = array<i64: 1, 384>}, {transform_indices = @transform_9, window_bounds = array<i64: 2, 384>}, {pipeline_mode = #tpu.pipeline_mode<synchronous>, transform_indices = @transform_10, window_bounds = array<i64: 2, 8>}]} {
    %c0 = arith.constant 0 : index
    %c0_0 = arith.constant 0 : index
    %0 = vector.load %arg1[%c0, %c0_0] : memref<2x64xf32, #tpu.memory_space<vmem>>, vector<2x64xf32>
    %c0_1 = arith.constant 0 : index
    %c0_2 = arith.constant 0 : index
    %1 = vector.load %arg2[%c0_1, %c0_2] : memref<64x64xf32, #tpu.memory_space<vmem>>, vector<64x64xf32>
    %cst = arith.constant dense<0.000000e+00> : vector<2x64xf32>
    %2 = tpu.matmul %0, %1, %cst {dimension_numbers = #tpu.dot_dimension_numbers<[1], [0], [0], [1], [0, 0, 1, 1], [], []>} : vector<2x64xf32>, vector<64x64xf32>, vector<2x64xf32> -> vector<2x64xf32>
    %c0_3 = arith.constant 0 : index
    %c0_4 = arith.constant 0 : index
    %3 = vector.load %arg3[%c0_3, %c0_4] : memref<1x64xf32, #tpu.memory_space<vmem>>, vector<1x64xf32>
    %4 = vector.broadcast %3 : vector<1x64xf32> to vector<2x64xf32>
    %5 = arith.addf %2, %4 : vector<2x64xf32>
    %cst_5 = arith.constant 0.000000e+00 : f32
    %6 = vector.broadcast %cst_5 : f32 to vector<2x64xf32>
    %7 = arith.cmpf ogt, %5, %6 : vector<2x64xf32>
    %cst_6 = arith.constant 0.00999999977 : f32
    %8 = vector.broadcast %cst_6 : f32 to vector<2x64xf32>
    %9 = arith.mulf %8, %5 : vector<2x64xf32>
    %10 = arith.select %7, %5, %9 : vector<2x64xi1>, vector<2x64xf32>
    %c0_7 = arith.constant 0 : index
    %c0_8 = arith.constant 0 : index
    %11 = vector.load %arg4[%c0_7, %c0_8] : memref<64x64xf32, #tpu.memory_space<vmem>>, vector<64x64xf32>
    %cst_9 = arith.constant dense<0.000000e+00> : vector<2x64xf32>
    %12 = tpu.matmul %10, %11, %cst_9 {dimension_numbers = #tpu.dot_dimension_numbers<[1], [0], [0], [1], [0, 0, 1, 1], [], []>} : vector<2x64xf32>, vector<64x64xf32>, vector<2x64xf32> -> vector<2x64xf32>
    %c0_10 = arith.constant 0 : index
    %c0_11 = arith.constant 0 : index
    %13 = vector.load %arg5[%c0_10, %c0_11] : memref<1x64xf32, #tpu.memory_space<vmem>>, vector<1x64xf32>
    %14 = vector.broadcast %13 : vector<1x64xf32> to vector<2x64xf32>
    %15 = arith.addf %12, %14 : vector<2x64xf32>
    %cst_12 = arith.constant 0.000000e+00 : f32
    %16 = vector.broadcast %cst_12 : f32 to vector<2x64xf32>
    %17 = arith.cmpf ogt, %15, %16 : vector<2x64xf32>
    %cst_13 = arith.constant 0.00999999977 : f32
    %18 = vector.broadcast %cst_13 : f32 to vector<2x64xf32>
    %19 = arith.mulf %18, %15 : vector<2x64xf32>
    %20 = arith.select %17, %15, %19 : vector<2x64xi1>, vector<2x64xf32>
    %c0_14 = arith.constant 0 : index
    %c0_15 = arith.constant 0 : index
    %21 = vector.load %arg6[%c0_14, %c0_15] : memref<64x8xf32, #tpu.memory_space<vmem>>, vector<64x8xf32>
    %cst_16 = arith.constant dense<0.000000e+00> : vector<2x8xf32>
    %22 = tpu.matmul %20, %21, %cst_16 {dimension_numbers = #tpu.dot_dimension_numbers<[1], [0], [0], [1], [0, 0, 1, 1], [], []>} : vector<2x64xf32>, vector<64x8xf32>, vector<2x8xf32> -> vector<2x8xf32>
    %c0_17 = arith.constant 0 : index
    %c0_18 = arith.constant 0 : index
    %23 = vector.load %arg7[%c0_17, %c0_18] : memref<1x8xf32, #tpu.memory_space<vmem>>, vector<1x8xf32>
    %24 = vector.broadcast %23 : vector<1x8xf32> to vector<2x8xf32>
    %25 = arith.addf %22, %24 : vector<2x8xf32>
    %c0_19 = arith.constant 0 : index
    %c0_20 = arith.constant 0 : index
    %26 = vector.load %arg11[%c0_19, %c0_20] : memref<2x8xf32, #tpu.memory_space<vmem>>, vector<2x8xf32>
    tpu.vector_store %arg11[%c0_19, %c0_20], %25 {strides = array<i32>} : memref<2x8xf32, #tpu.memory_space<vmem>>, vector<2x8xf32>,
    %27 = arith.truncf %20 : vector<2x64xf32> to vector<2x64xbf16>
    %c0_21 = arith.constant 0 : index
    %c0_22 = arith.constant 0 : index
    %28 = vector.load %arg8[%c0_21, %c0_22] : memref<64x384xbf16, #tpu.memory_space<vmem>>, vector<64x384xbf16>
    %cst_23 = arith.constant dense<0.000000e+00> : vector<2x384xf32>
    %29 = tpu.matmul %27, %28, %cst_23 {dimension_numbers = #tpu.dot_dimension_numbers<[1], [0], [0], [1], [0, 0, 1, 1], [], []>} : vector<2x64xbf16>, vector<64x384xbf16>, vector<2x384xf32> -> vector<2x384xf32>
    %c0_24 = arith.constant 0 : index
    %c0_25 = arith.constant 0 : index
    %30 = vector.load %arg9[%c0_24, %c0_25] : memref<1x384xf32, #tpu.memory_space<vmem>>, vector<1x384xf32>
    %31 = vector.broadcast %30 : vector<1x384xf32> to vector<2x384xf32>
    %32 = arith.addf %29, %31 : vector<2x384xf32>
    %33 = arith.truncf %32 : vector<2x384xf32> to vector<2x384xbf16>
    %c0_26 = arith.constant 0 : index
    %c0_27 = arith.constant 0 : index
    %34 = vector.load %arg10[%c0_26, %c0_27] : memref<2x384xbf16, #tpu.memory_space<vmem>>, vector<2x384xbf16>
    tpu.vector_store %arg10[%c0_26, %c0_27], %33 {strides = array<i32>} : memref<2x384xbf16, #tpu.memory_space<vmem>>, vector<2x384xbf16>,
    return
  }
  func.func @transform_0(%arg0: i32) -> (i32, i32) {
    %c0_i32 = arith.constant 0 : i32
    %c0_i32_0 = arith.constant 0 : i32
    %c0_i32_1 = arith.constant 0 : i32
    return %c0_i32, %c0_i32_0 : i32, i32
  }
  func.func @transform_1(%arg0: i32) -> (i32, i32) {
    %c0_i32 = arith.constant 0 : i32
    %c0_i32_0 = arith.constant 0 : i32
    %c0_i32_1 = arith.constant 0 : i32
    return %c0_i32, %c0_i32_0 : i32, i32
  }
  func.func @transform_2(%arg0: i32) -> (i32, i32) {
    %c0_i32 = arith.constant 0 : i32
    %c0_i32_0 = arith.constant 0 : i32
    %c0_i32_1 = arith.constant 0 : i32
    return %c0_i32, %c0_i32_0 : i32, i32
  }
  func.func @transform_3(%arg0: i32) -> (i32, i32) {
    %c0_i32 = arith.constant 0 : i32
    %c0_i32_0 = arith.constant 0 : i32
    %c0_i32_1 = arith.constant 0 : i32
    return %c0_i32, %c0_i32_0 : i32, i32
  }
  func.func @transform_4(%arg0: i32) -> (i32, i32) {
    %c0_i32 = arith.constant 0 : i32
    %c0_i32_0 = arith.constant 0 : i32
    %c0_i32_1 = arith.constant 0 : i32
    return %c0_i32, %c0_i32_0 : i32, i32
  }
  func.func @transform_5(%arg0: i32) -> (i32, i32) {
    %c0_i32 = arith.constant 0 : i32
    %c0_i32_0 = arith.constant 0 : i32
    %c0_i32_1 = arith.constant 0 : i32
    return %c0_i32, %c0_i32_0 : i32, i32
  }
  func.func @transform_6(%arg0: i32) -> (i32, i32) {
    %c0_i32 = arith.constant 0 : i32
    %c0_i32_0 = arith.constant 0 : i32
    %c0_i32_1 = arith.constant 0 : i32
    return %c0_i32, %c0_i32_0 : i32, i32
  }
  func.func @transform_7(%arg0: i32) -> (i32, i32) {
    %c0_i32 = arith.constant 0 : i32
    %c0_i32_0 = arith.constant 0 : i32
    return %c0_i32, %arg0 : i32, i32
  }
  func.func @transform_8(%arg0: i32) -> (i32, i32) {
    %c0_i32 = arith.constant 0 : i32
    %c0_i32_0 = arith.constant 0 : i32
    return %c0_i32, %arg0 : i32, i32
  }
  func.func @transform_9(%arg0: i32) -> (i32, i32) {
    %c0_i32 = arith.constant 0 : i32
    %c0_i32_0 = arith.constant 0 : i32
    return %c0_i32, %arg0 : i32, i32
  }
  func.func @transform_10(%arg0: i32) -> (i32, i32) {
    %c0_i32 = arith.constant 0 : i32
    %c0_i32_0 = arith.constant 0 : i32
    %c0_i32_1 = arith.constant 0 : i32
    return %c0_i32, %c0_i32_0 : i32, i32
  }
}

</mosaic_0001>

<llo_original>
// kernel: tpu_custom_call.1
$region0: #{tpu_custom_call.1}
  #allocation0 [shape = 'u32[]', space=smem, size = 0x4, offset = 0x4, fixed_abs, tag = 'smem constant byte address 0x4 - core index']
  #allocation1 [shape = 'u32[144,128]{1,0:T(1,128)}', space=vmem, size = 0x12000, scoped, tag = 'internal scratch']
  %s0 = inlined_call_operand.vmem [shape: f32[2,64], index: 0, kind: input, shape index: {}]
  %s1 = inlined_call_operand.vmem [shape: f32[64,64], index: 1, kind: input, shape index: {}]
  %s2 = inlined_call_operand.vmem [shape: f32[1,64], index: 2, kind: input, shape index: {}]
  %s3 = inlined_call_operand.hbm [shape: f32[64,64], index: 3, kind: input, shape index: {}]
  %s4 = inlined_call_operand.vmem [shape: f32[1,64], index: 4, kind: input, shape index: {}]
  %s5 = inlined_call_operand.vmem [shape: f32[64,8], index: 5, kind: input, shape index: {}]
  %s6 = inlined_call_operand.vmem [shape: f32[1,8], index: 6, kind: input, shape index: {}]
  %s7 = inlined_call_operand.hbm [shape: bf16[64,384], index: 7, kind: input, shape index: {}]
  %s8 = inlined_call_operand.vmem [shape: f32[1,384], index: 8, kind: input, shape index: {}]
  %s9 = inlined_call_operand.hbm [shape: bf16[2,384], index: 9, kind: output, shape index: {0}]
  %s10 = inlined_call_operand.hbm [shape: f32[2,8], index: 10, kind: output, shape index: {1}]
  %11 = xla_tuple %s9, %s10
  %s12 = sld [smem:[#allocation0]]
  $region62: #{tpu_custom_call.1} parent=0
    _
  %s14 = ssub.s32 1, %s12
  %s15 = scalar_select 0, %s14, %s12
  $region1: #{tpu_custom_call.1} parent=0
    #allocation2 [shape = 'u8[32768]{0}', space=vmem, size = 0x8000, scoped, tag = 'input window, operand 3, single buffered']
    #allocation3 [shape = 's32[1]{0}', space=sflag, size = 0x4, scoped, tag = 'scoped memory for tpu_custom_call.1']
    #allocation4 [shape = 's32[1]{0}', space=sflag, size = 0x4, scoped, tag = 'scoped memory for tpu_custom_call.1']
    #allocation5 [shape = 'u8[49152]{0}', space=vmem, size = 0xc000, scoped, tag = 'input window, operand 7, single buffered']
    #allocation6 [shape = 's32[1]{0}', space=sflag, size = 0x4, scoped, tag = 'scoped memory for tpu_custom_call.1']
    #allocation7 [shape = 'u8[1536]{0}', space=vmem, size = 0x800, scoped, tag = 'output window, operand 0, single buffered']
    #allocation8 [shape = 'u8[1024]{0}', space=vmem, size = 0x400, scoped, tag = 'output window, operand 1, single buffered']
    #allocation9 [shape = 's32[1]{0}', space=sflag, size = 0x4, scoped, tag = 'scoped memory for tpu_custom_call.1']
    %16 = vsyncpa [#allocation3], 0
    %17 = vsyncpa [#allocation6], 0
    %18 = vsyncpa [#allocation4], 0
    %19 = vsyncpa [#allocation9], 0
    // Predicated region
    $region2: #{tpu_custom_call.1} parent=1 // pred_check
      _
    $region3: #{tpu_custom_call.1} parent=1 // pred_check_branch
      %21 = sbr.rel (0) target = $region5
    $region4: #{tpu_custom_call.1} parent=1 // pred_region
      _
    $region5: #{tpu_custom_call.1} parent=1 // pred_fallthru
      _
    // Predicated region
    $region6: #{tpu_custom_call.1} parent=1 // pred_check
      _
    $region7: #{tpu_custom_call.1} parent=1 // pred_check_branch
      %23 = sbr.rel (0) target = $region9
    $region8: #{tpu_custom_call.1} parent=1 // pred_region
      _
    $region9: #{tpu_custom_call.1} parent=1 // pred_fallthru
      _
    // Predicated region
    $region10: #{tpu_custom_call.1} parent=1 // pred_check
      _
    $region11: #{tpu_custom_call.1} parent=1 // pred_check_branch
      %25 = sbr.rel (0) target = $region13
    $region12: #{tpu_custom_call.1} parent=1 // pred_region
      _
    $region13: #{tpu_custom_call.1} parent=1 // pred_fallthru
      _
    // Predicated region
    $region14: #{tpu_custom_call.1} parent=1 // pred_check
      _
    $region15: #{tpu_custom_call.1} parent=1 // pred_check_branch
      %27 = sbr.rel (0) target = $region17
    $region16: #{tpu_custom_call.1} parent=1 // pred_region
      %s29 = ssub.s32 1024, 1024
      %30 = vsyncadd [#allocation3], %s29
      %s31 = sshll.u32 [#allocation2], 4
      %s32 = int_to_ptr.vmem [resolvable:$true] %s31
      %37 = dma.hbm_to_vmem [thread:$0]  %s3, 1024, %s32, [#allocation3], 128, 128, 8
    $region17: #{tpu_custom_call.1} parent=1 // pred_fallthru
      _
    // Predicated region
    $region18: #{tpu_custom_call.1} parent=1 // pred_check
      _
    $region19: #{tpu_custom_call.1} parent=1 // pred_check_branch
      %39 = sbr.rel (0) target = $region21
    $region20: #{tpu_custom_call.1} parent=1 // pred_region
      _
    $region21: #{tpu_custom_call.1} parent=1 // pred_fallthru
      _
    // Predicated region
    $region22: #{tpu_custom_call.1} parent=1 // pred_check
      _
    $region23: #{tpu_custom_call.1} parent=1 // pred_check_branch
      %41 = sbr.rel (0) target = $region25
    $region24: #{tpu_custom_call.1} parent=1 // pred_region
      _
    $region25: #{tpu_custom_call.1} parent=1 // pred_fallthru
      _
    // Predicated region
    $region26: #{tpu_custom_call.1} parent=1 // pred_check
      _
    $region27: #{tpu_custom_call.1} parent=1 // pred_check_branch
      %43 = sbr.rel (0) target = $region29
    $region28: #{tpu_custom_call.1} parent=1 // pred_region
      _
    $region29: #{tpu_custom_call.1} parent=1 // pred_fallthru
      _
    // Predicated region
    $region30: #{tpu_custom_call.1} parent=1 // pred_check
      _
    $region31: #{tpu_custom_call.1} parent=1 // pred_check_branch
      %45 = sbr.rel (0) target = $region33
    $region32: #{tpu_custom_call.1} parent=1 // pred_region
      %s47 = ssub.s32 1536, 1536
      %48 = vsyncadd [#allocation6], %s47
      %s49 = sshll.u32 [#allocation5], 4
      %s50 = int_to_ptr.vmem [resolvable:$true] %s49
      %55 = dma.hbm_to_vmem [thread:$0]  %s7, 1536, %s50, [#allocation6], 192, 192, 12
    $region33: #{tpu_custom_call.1} parent=1 // pred_fallthru
      _
    // Predicated region
    $region34: #{tpu_custom_call.1} parent=1 // pred_check
      _
    $region35: #{tpu_custom_call.1} parent=1 // pred_check_branch
      %57 = sbr.rel (0) target = $region37
    $region36: #{tpu_custom_call.1} parent=1 // pred_region
      _
    $region37: #{tpu_custom_call.1} parent=1 // pred_fallthru
      _
    // Predicated region
    $region38: #{tpu_custom_call.1} parent=1 // pred_check
      _
    $region39: #{tpu_custom_call.1} parent=1 // pred_check_branch
      %59 = sbr.rel (0) target = $region41
    $region40: #{tpu_custom_call.1} parent=1 // pred_region
      %60 = dma.done [#allocation3], 1024
    $region41: #{tpu_custom_call.1} parent=1 // pred_fallthru
      _
    // Predicated region
    $region42: #{tpu_custom_call.1} parent=1 // pred_check
      _
    $region43: #{tpu_custom_call.1} parent=1 // pred_check_branch
      %62 = sbr.rel (0) target = $region45
    $region44: #{tpu_custom_call.1} parent=1 // pred_region
      %63 = dma.done [#allocation6], 1536
    $region45: #{tpu_custom_call.1} parent=1 // pred_fallthru
      _
    %v65 = vld [vmem:[%s0] sm:$0x3]
    %v66 = vld [vmem:[%s1] sm:$0xff]
    %v67 = vld [vmem:[%s1 + $0x8] sm:$0xff]
    %v68 = vld [vmem:[%s1 + $0x10] sm:$0xff]
    %v69 = vld [vmem:[%s1 + $0x18] sm:$0xff]
    %v70 = vld [vmem:[%s1 + $0x20] sm:$0xff]
    %v71 = vld [vmem:[%s1 + $0x28] sm:$0xff]
    %v72 = vld [vmem:[%s1 + $0x30] sm:$0xff]
    %v73 = vld [vmem:[%s1 + $0x38] sm:$0xff]
    %v74 = vld [vmem:[%s2] sm:$0x1]
    %v76 = vlaneseq
    %v77 = vshrl.u32 %v76, 7
    %v78 = vsub.s32 0, %v77
    %v79 = vrot.slane %v74, %v78
    %vm81 = vcmask 523264
    %v83 = vsel %vm81, %v65, 0
    %85 = vmatprep.subr.mxu0 0.0
    %86 = vmatpush1.msra.mxu0 0.0
    %87 = vmatprep.subr.mxu0 0.0
    %88 = vmatpush1.msra.mxu0 0.0
    %89 = vmatprep.subr.mxu0 0.0
    %90 = vmatpush1.msra.mxu0 0.0
    %91 = vmatprep.subr.mxu0 0.0
    %92 = vmatpush1.msra.mxu0 0.0
    %93 = vmatprep.subr.mxu0 0.0
    %94 = vmatpush1.msra.mxu0 0.0
    %95 = vmatprep.subr.mxu0 0.0
    %96 = vmatpush1.msra.mxu0 0.0
    %97 = vmatprep.subr.mxu0 0.0
    %98 = vmatpush1.msra.mxu0 0.0
    %99 = vmatprep.subr.mxu0 0.0
    %100 = vmatpush1.msra.mxu0 0.0
    %101 = vmatprep.subr.mxu0 0.0
    %102 = vmatpush1.msra.mxu0 %v73
    %103 = vmatprep.subr.mxu0 0.0
    %104 = vmatpush1.msra.mxu0 %v72
    %105 = vmatprep.subr.mxu0 0.0
    %106 = vmatpush1.msra.mxu0 %v71
    %107 = vmatprep.subr.mxu0 0.0
    %108 = vmatpush1.msra.mxu0 %v70
    %109 = vmatprep.subr.mxu0 0.0
    %110 = vmatpush1.msra.mxu0 %v69
    %111 = vmatprep.subr.mxu0 0.0
    %112 = vmatpush1.msra.mxu0 %v68
    %113 = vmatprep.subr.mxu0 0.0
    %114 = vmatpush1.msra.mxu0 %v67
    %115 = vmatprep.subr.mxu0 0.0
    %116 = vmatpush1.msra.mxu0 %v66
    %117 = vmatprep.subr.mxu0 0.0
    %118 = vmatpush2.msra.mxu0 0.0
    %119 = vmatprep.subr.mxu0 0.0
    %120 = vmatpush2.msra.mxu0 0.0
    %121 = vmatprep.subr.mxu0 0.0
    %122 = vmatpush2.msra.mxu0 0.0
    %123 = vmatprep.subr.mxu0 0.0
    %124 = vmatpush2.msra.mxu0 0.0
    %125 = vmatprep.subr.mxu0 0.0
    %126 = vmatpush2.msra.mxu0 0.0
    %127 = vmatprep.subr.mxu0 0.0
    %128 = vmatpush2.msra.mxu0 0.0
    %129 = vmatprep.subr.mxu0 0.0
    %130 = vmatpush2.msra.mxu0 0.0
    %131 = vmatprep.subr.mxu0 0.0
    %132 = vmatpush2.msra.mxu0 0.0
    %133 = vmatprep.subr.mxu0 0.0
    %134 = vmatpush2.msra.mxu0 0.0
    %135 = vmatprep.subr.mxu0 0.0
    %136 = vmatpush2.msra.mxu0 0.0
    %137 = vmatprep.subr.mxu0 0.0
    %138 = vmatpush2.msra.mxu0 0.0
    %139 = vmatprep.subr.mxu0 0.0
    %140 = vmatpush2.msra.mxu0 0.0
    %141 = vmatprep.subr.mxu0 0.0
    %142 = vmatpush2.msra.mxu0 0.0
    %143 = vmatprep.subr.mxu0 0.0
    %144 = vmatpush2.msra.mxu0 0.0
    %145 = vmatprep.subr.mxu0 0.0
    %146 = vmatpush2.msra.mxu0 0.0
    %147 = vmatprep.subr.mxu0 0.0
    %148 = vmatpush2.msra.mxu0 0.0
    %149 = vmatprep.mubr.f32.mxu0 0.0
    %150 = vmatmul.mubr.f32.gmra.mxu0 %v83
    %v151 = vpop.f32.mrf.mxu0
    %v152 = vadd.f32 %v79, %v151
    %v153 = vpop.f32.mrf.mxu0
    %154 = vdwg.mxu0
    %vm155 = vcmp.gt.f32.partialorder %v152, 0.0
    %v156 = vmul.f32 %v152, 0.01
    %v157 = vsel %vm155, %v152, %v156
    %v158 = vld [vmem:[#allocation2] sm:$0xff]
    %v159 = vld [vmem:[#allocation2 + $0x8] sm:$0xff]
    %v160 = vld [vmem:[#allocation2 + $0x10] sm:$0xff]
    %v161 = vld [vmem:[#allocation2 + $0x18] sm:$0xff]
    %v162 = vld [vmem:[#allocation2 + $0x20] sm:$0xff]
    %v163 = vld [vmem:[#allocation2 + $0x28] sm:$0xff]
    %v164 = vld [vmem:[#allocation2 + $0x30] sm:$0xff]
    %v165 = vld [vmem:[#allocation2 + $0x38] sm:$0xff]
    %v166 = vld [vmem:[%s4] sm:$0x1]
    %v168 = vlaneseq
    %v169 = vshrl.u32 %v168, 7
    %v170 = vsub.s32 0, %v169
    %v171 = vrot.slane %v166, %v170
    %v174 = vsel %vm81, %v157, 0
    %176 = vmatprep.subr.mxu0 0.0
    %177 = vmatpush1.msra.mxu0 0.0
    %178 = vmatprep.subr.mxu0 0.0
    %179 = vmatpush1.msra.mxu0 0.0
    %180 = vmatprep.subr.mxu0 0.0
    %181 = vmatpush1.msra.mxu0 0.0
    %182 = vmatprep.subr.mxu0 0.0
    %183 = vmatpush1.msra.mxu0 0.0
    %184 = vmatprep.subr.mxu0 0.0
    %185 = vmatpush1.msra.mxu0 0.0
    %186 = vmatprep.subr.mxu0 0.0
    %187 = vmatpush1.msra.mxu0 0.0
    %188 = vmatprep.subr.mxu0 0.0
    %189 = vmatpush1.msra.mxu0 0.0
    %190 = vmatprep.subr.mxu0 0.0
    %191 = vmatpush1.msra.mxu0 0.0
    %192 = vmatprep.subr.mxu0 0.0
    %193 = vmatpush1.msra.mxu0 %v165
    %194 = vmatprep.subr.mxu0 0.0
    %195 = vmatpush1.msra.mxu0 %v164
    %196 = vmatprep.subr.mxu0 0.0
    %197 = vmatpush1.msra.mxu0 %v163
    %198 = vmatprep.subr.mxu0 0.0
    %199 = vmatpush1.msra.mxu0 %v162
    %200 = vmatprep.subr.mxu0 0.0
    %201 = vmatpush1.msra.mxu0 %v161
    %202 = vmatprep.subr.mxu0 0.0
    %203 = vmatpush1.msra.mxu0 %v160
    %204 = vmatprep.subr.mxu0 0.0
    %205 = vmatpush1.msra.mxu0 %v159
    %206 = vmatprep.subr.mxu0 0.0
    %207 = vmatpush1.msra.mxu0 %v158
    %208 = vmatprep.subr.mxu0 0.0
    %209 = vmatpush2.msra.mxu0 0.0
    %210 = vmatprep.subr.mxu0 0.0
    %211 = vmatpush2.msra.mxu0 0.0
    %212 = vmatprep.subr.mxu0 0.0
    %213 = vmatpush2.msra.mxu0 0.0
    %214 = vmatprep.subr.mxu0 0.0
    %215 = vmatpush2.msra.mxu0 0.0
    %216 = vmatprep.subr.mxu0 0.0
    %217 = vmatpush2.msra.mxu0 0.0
    %218 = vmatprep.subr.mxu0 0.0
    %219 = vmatpush2.msra.mxu0 0.0
    %220 = vmatprep.subr.mxu0 0.0
    %221 = vmatpush2.msra.mxu0 0.0
    %222 = vmatprep.subr.mxu0 0.0
    %223 = vmatpush2.msra.mxu0 0.0
    %224 = vmatprep.subr.mxu0 0.0
    %225 = vmatpush2.msra.mxu0 0.0
    %226 = vmatprep.subr.mxu0 0.0
    %227 = vmatpush2.msra.mxu0 0.0
    %228 = vmatprep.subr.mxu0 0.0
    %229 = vmatpush2.msra.mxu0 0.0
    %230 = vmatprep.subr.mxu0 0.0
    %231 = vmatpush2.msra.mxu0 0.0
    %232 = vmatprep.subr.mxu0 0.0
    %233 = vmatpush2.msra.mxu0 0.0
    %234 = vmatprep.subr.mxu0 0.0
    %235 = vmatpush2.msra.mxu0 0.0
    %236 = vmatprep.subr.mxu0 0.0
    %237 = vmatpush2.msra.mxu0 0.0
    %238 = vmatprep.subr.mxu0 0.0
    %239 = vmatpush2.msra.mxu0 0.0
    %240 = vmatprep.mubr.f32.mxu0 0.0
    %241 = vmatmul.mubr.f32.gmra.mxu0 %v174
    %v242 = vpop.f32.mrf.mxu0
    %v243 = vadd.f32 %v171, %v242
    %v244 = vpop.f32.mrf.mxu0
    %245 = vdwg.mxu0
    %vm246 = vcmp.gt.f32.partialorder %v243, 0.0
    %v247 = vmul.f32 %v243, 0.01
    %v248 = vsel %vm246, %v243, %v247
    %v249 = vld [vmem:[%s5] sm:$0xff]
    %v250 = vld [vmem:[%s5 + $0x8] sm:$0xff]
    %v251 = vld [vmem:[%s5 + $0x10] sm:$0xff]
    %v252 = vld [vmem:[%s5 + $0x18] sm:$0xff]
    %v253 = vld [vmem:[%s5 + $0x20] sm:$0xff]
    %v254 = vld [vmem:[%s5 + $0x28] sm:$0xff]
    %v255 = vld [vmem:[%s5 + $0x30] sm:$0xff]
    %v256 = vld [vmem:[%s5 + $0x38] sm:$0xff]
    %v257 = vld [vmem:[%s6] sm:$0x1]
    %v259 = vlaneseq
    %v260 = vshrl.u32 %v259, 7
    %v261 = vsub.s32 0, %v260
    %v262 = vrot.slane %v257, %v261
    %v265 = vsel %vm81, %v248, 0
    %267 = vmatprep.subr.mxu0 0.0
    %268 = vmatpush1.msra.mxu0 0.0
    %269 = vmatprep.subr.mxu0 0.0
    %270 = vmatpush1.msra.mxu0 0.0
    %271 = vmatprep.subr.mxu0 0.0
    %272 = vmatpush1.msra.mxu0 0.0
    %273 = vmatprep.subr.mxu0 0.0
    %274 = vmatpush1.msra.mxu0 0.0
    %275 = vmatprep.subr.mxu0 0.0
    %276 = vmatpush1.msra.mxu0 0.0
    %277 = vmatprep.subr.mxu0 0.0
    %278 = vmatpush1.msra.mxu0 0.0
    %279 = vmatprep.subr.mxu0 0.0
    %280 = vmatpush1.msra.mxu0 0.0
    %281 = vmatprep.subr.mxu0 0.0
    %282 = vmatpush1.msra.mxu0 0.0
    %283 = vmatprep.subr.mxu0 0.0
    %284 = vmatpush1.msra.mxu0 %v256
    %285 = vmatprep.subr.mxu0 0.0
    %286 = vmatpush1.msra.mxu0 %v255
    %287 = vmatprep.subr.mxu0 0.0
    %288 = vmatpush1.msra.mxu0 %v254
    %289 = vmatprep.subr.mxu0 0.0
    %290 = vmatpush1.msra.mxu0 %v253
    %291 = vmatprep.subr.mxu0 0.0
    %292 = vmatpush1.msra.mxu0 %v252
    %293 = vmatprep.subr.mxu0 0.0
    %294 = vmatpush1.msra.mxu0 %v251
    %295 = vmatprep.subr.mxu0 0.0
    %296 = vmatpush1.msra.mxu0 %v250
    %297 = vmatprep.subr.mxu0 0.0
    %298 = vmatpush1.msra.mxu0 %v249
    %299 = vmatprep.subr.mxu0 0.0
    %300 = vmatpush2.msra.mxu0 0.0
    %301 = vmatprep.subr.mxu0 0.0
    %302 = vmatpush2.msra.mxu0 0.0
    %303 = vmatprep.subr.mxu0 0.0
    %304 = vmatpush2.msra.mxu0 0.0
    %305 = vmatprep.subr.mxu0 0.0
    %306 = vmatpush2.msra.mxu0 0.0
    %307 = vmatprep.subr.mxu0 0.0
    %308 = vmatpush2.msra.mxu0 0.0
    %309 = vmatprep.subr.mxu0 0.0
    %310 = vmatpush2.msra.mxu0 0.0
    %311 = vmatprep.subr.mxu0 0.0
    %312 = vmatpush2.msra.mxu0 0.0
    %313 = vmatprep.subr.mxu0 0.0
    %314 = vmatpush2.msra.mxu0 0.0
    %315 = vmatprep.subr.mxu0 0.0
    %316 = vmatpush2.msra.mxu0 0.0
    %317 = vmatprep.subr.mxu0 0.0
    %318 = vmatpush2.msra.mxu0 0.0
    %319 = vmatprep.subr.mxu0 0.0
    %320 = vmatpush2.msra.mxu0 0.0
    %321 = vmatprep.subr.mxu0 0.0
    %322 = vmatpush2.msra.mxu0 0.0
    %323 = vmatprep.subr.mxu0 0.0
    %324 = vmatpush2.msra.mxu0 0.0
    %325 = vmatprep.subr.mxu0 0.0
    %326 = vmatpush2.msra.mxu0 0.0
    %327 = vmatprep.subr.mxu0 0.0
    %328 = vmatpush2.msra.mxu0 0.0
    %329 = vmatprep.subr.mxu0 0.0
    %330 = vmatpush2.msra.mxu0 0.0
    %331 = vmatprep.mubr.f32.mxu0 0.0
    %332 = vmatmul.mubr.f32.gmra.mxu0 %v265
    %v333 = vpop.f32.mrf.mxu0
    %v334 = vadd.f32 %v262, %v333
    %v335 = vpop.f32.mrf.mxu0
    %336 = vdwg.mxu0
    %vm337 = vcmask 58368
    %338 = vst.msk [vmem:[#allocation8] sm:$0x3] %vm337, %v334
    %v339 = vpack.c.bf16 %v248, %v248
    %v340 = vld [vmem:[#allocation5] sm:$0xff]
    %v341 = vld [vmem:[#allocation5 + $0x8] sm:$0xf]
    %v342 = vld [vmem:[#allocation5 + $0xc] sm:$0xff]
    %v343 = vld [vmem:[#allocation5 + $0x14] sm:$0xf]
    %v344 = vld [vmem:[#allocation5 + $0x18] sm:$0xff]
    %v345 = vld [vmem:[#allocation5 + $0x20] sm:$0xf]
    %v346 = vld [vmem:[#allocation5 + $0x24] sm:$0xff]
    %v347 = vld [vmem:[#allocation5 + $0x2c] sm:$0xf]
    %v348 = vld [vmem:[#allocation5 + $0x30] sm:$0xff]
    %v349 = vld [vmem:[#allocation5 + $0x38] sm:$0xf]
    %v350 = vld [vmem:[#allocation5 + $0x3c] sm:$0xff]
    %v351 = vld [vmem:[#allocation5 + $0x44] sm:$0xf]
    %v352 = vld [vmem:[#allocation5 + $0x48] sm:$0xff]
    %v353 = vld [vmem:[#allocation5 + $0x50] sm:$0xf]
    %v354 = vld [vmem:[#allocation5 + $0x54] sm:$0xff]
    %v355 = vld [vmem:[#allocation5 + $0x5c] sm:$0xf]
    %v356 = vld [vmem:[%s8] sm:$0x7]
    %v358 = vlaneseq
    %v359 = vshrl.u32 %v358, 7
    %v360 = vsub.s32 0, %v359
    %v361 = vrot.slane %v356, %v360
    %v362 = vlaneseq
    %v363 = vshrl.u32 %v362, 7
    %v364 = vsub.s32 1, %v363
    %v365 = vrot.slane %v356, %v364
    %v366 = vlaneseq
    %v367 = vshrl.u32 %v366, 7
    %v368 = vsub.s32 2, %v367
    %v369 = vrot.slane %v356, %v368
    %v389 = vunpack.c.l.b16 %v340
    %v390 = vunpack.c.h.b16 %v340
    %v391 = vunpack.c.l.b16 %v341
    %v392 = vunpack.c.l.b16 %v342
    %v393 = vunpack.c.h.b16 %v342
    %v394 = vunpack.c.l.b16 %v343
    %v395 = vunpack.c.l.b16 %v344
    %v396 = vunpack.c.h.b16 %v344
    %v397 = vunpack.c.l.b16 %v345
    %v398 = vunpack.c.l.b16 %v346
    %v399 = vunpack.c.h.b16 %v346
    %v400 = vunpack.c.l.b16 %v347
    %v401 = vunpack.c.l.b16 %v348
    %v402 = vunpack.c.h.b16 %v348
    %v403 = vunpack.c.l.b16 %v349
    %v404 = vunpack.c.l.b16 %v350
    %v405 = vunpack.c.h.b16 %v350
    %v406 = vunpack.c.l.b16 %v351
    %v407 = vunpack.c.l.b16 %v352
    %v408 = vunpack.c.h.b16 %v352
    %v409 = vunpack.c.l.b16 %v353
    %v410 = vunpack.c.l.b16 %v354
    %v411 = vunpack.c.h.b16 %v354
    %v412 = vunpack.c.l.b16 %v355
    %v413 = vpack.c.b16 %v392, %v389
    %v414 = vpack.c.b16 %v393, %v390
    %v415 = vpack.c.b16 %v394, %v391
    %v416 = vpack.c.b16 %v398, %v395
    %v417 = vpack.c.b16 %v399, %v396
    %v418 = vpack.c.b16 %v400, %v397
    %v419 = vpack.c.b16 %v404, %v401
    %v420 = vpack.c.b16 %v405, %v402
    %v421 = vpack.c.b16 %v406, %v403
    %v422 = vpack.c.b16 %v410, %v407
    %v423 = vpack.c.b16 %v411, %v408
    %v424 = vpack.c.b16 %v412, %v409
    %v438 = vsel %vm81, %v339, 0
    %440 = vmatprep.subr.bf16.mxu0 0
    %441 = vmatpush1.bf16.msra.mxu0 0
    %442 = vmatprep.subr.bf16.mxu0 0
    %443 = vmatpush1.bf16.msra.mxu0 0
    %444 = vmatprep.subr.bf16.mxu0 0
    %445 = vmatpush1.bf16.msra.mxu0 0
    %446 = vmatprep.subr.bf16.mxu0 0
    %447 = vmatpush1.bf16.msra.mxu0 0
    %448 = vmatprep.subr.bf16.mxu0 %v423
    %449 = vmatpush1.bf16.msra.mxu0 %v422
    %450 = vmatprep.subr.bf16.mxu0 %v420
    %451 = vmatpush1.bf16.msra.mxu0 %v419
    %452 = vmatprep.subr.bf16.mxu0 %v417
    %453 = vmatpush1.bf16.msra.mxu0 %v416
    %454 = vmatprep.subr.bf16.mxu0 %v414
    %455 = vmatpush1.bf16.msra.mxu0 %v413
    %456 = vmatprep.subr.bf16.mxu0 0
    %457 = vmatpush2.bf16.msra.mxu0 0
    %458 = vmatprep.subr.bf16.mxu0 0
    %459 = vmatpush2.bf16.msra.mxu0 0
    %460 = vmatprep.subr.bf16.mxu0 0
    %461 = vmatpush2.bf16.msra.mxu0 0
    %462 = vmatprep.subr.bf16.mxu0 0
    %463 = vmatpush2.bf16.msra.mxu0 0
    %464 = vmatprep.subr.bf16.mxu0 0
    %465 = vmatpush2.bf16.msra.mxu0 0
    %466 = vmatprep.subr.bf16.mxu0 0
    %467 = vmatpush2.bf16.msra.mxu0 0
    %468 = vmatprep.subr.bf16.mxu0 0
    %469 = vmatpush2.bf16.msra.mxu0 0
    %470 = vmatprep.subr.bf16.mxu0 0
    %471 = vmatpush2.bf16.msra.mxu0 0
    %472 = vmatprep.mubr.bf16.mxu0 0
    %473 = vmatmul.mubr.bf16.gmra.mxu0 %v438
    %v474 = vpop.f32.mrf.mxu0
    %v475 = vadd.f32 %v361, %v474
    %v476 = vpop.f32.mrf.mxu0
    %v477 = vadd.f32 %v365, %v476
    %v478 = vpop.f32.mrf.mxu0
    %v479 = vpop.f32.mrf.mxu0
    %480 = vdwg.mxu0
    %481 = vmatprep.subr.bf16.mxu0 0
    %482 = vmatpush1.bf16.msra.mxu0 0
    %483 = vmatprep.subr.bf16.mxu0 0
    %484 = vmatpush1.bf16.msra.mxu0 0
    %485 = vmatprep.subr.bf16.mxu0 0
    %486 = vmatpush1.bf16.msra.mxu0 0
    %487 = vmatprep.subr.bf16.mxu0 0
    %488 = vmatpush1.bf16.msra.mxu0 0
    %489 = vmatprep.subr.bf16.mxu0 0
    %490 = vmatpush1.bf16.msra.mxu0 %v424
    %491 = vmatprep.subr.bf16.mxu0 0
    %492 = vmatpush1.bf16.msra.mxu0 %v421
    %493 = vmatprep.subr.bf16.mxu0 0
    %494 = vmatpush1.bf16.msra.mxu0 %v418
    %495 = vmatprep.subr.bf16.mxu0 0
    %496 = vmatpush1.bf16.msra.mxu0 %v415
    %497 = vmatprep.subr.bf16.mxu0 0
    %498 = vmatpush2.bf16.msra.mxu0 0
    %499 = vmatprep.subr.bf16.mxu0 0
    %500 = vmatpush2.bf16.msra.mxu0 0
    %501 = vmatprep.subr.bf16.mxu0 0
    %502 = vmatpush2.bf16.msra.mxu0 0
    %503 = vmatprep.subr.bf16.mxu0 0
    %504 = vmatpush2.bf16.msra.mxu0 0
    %505 = vmatprep.subr.bf16.mxu0 0
    %506 = vmatpush2.bf16.msra.mxu0 0
    %507 = vmatprep.subr.bf16.mxu0 0
    %508 = vmatpush2.bf16.msra.mxu0 0
    %509 = vmatprep.subr.bf16.mxu0 0
    %510 = vmatpush2.bf16.msra.mxu0 0
    %511 = vmatprep.subr.bf16.mxu0 0
    %512 = vmatpush2.bf16.msra.mxu0 0
    %513 = vmatprep.mubr.bf16.mxu0 0
    %514 = vmatmul.mubr.bf16.gmra.mxu0 %v438
    %v515 = vpop.f32.mrf.mxu0
    %v516 = vadd.f32 %v369, %v515
    %v517 = vpop.f32.mrf.mxu0
    %v518 = vpop.f32.mrf.mxu0
    %v519 = vpop.f32.mrf.mxu0
    %520 = vdwg.mxu0
    %v521 = vpack.c.bf16 %v475, %v475
    %v522 = vpack.c.bf16 %v477, %v477
    %v523 = vpack.c.bf16 %v516, %v516
    %v527 = vcombine.low %v521, %v522
    %v529 = vunpack.c.l.s4 1966171168
    %v530 = vunpack.c.0.s8 %v529
    %v531 = vlaneseq
    %v532 = vshrl.u32 %v531, 7
    %v533 = vsub.s32 %v530, %v532
    %v534 = vrot.slane %v527, %v533
    %v536 = vunpack.c.l.s4 1966171168
    %v537 = vunpack.c.0.s8 %v536
    %v538 = vlaneseq
    %v539 = vshrl.u32 %v538, 7
    %v540 = vsub.s32 %v537, %v539
    %v541 = vrot.slane %v523, %v540
    %v542 = vcombine.low %v534, %v541
    %v544 = vunpack.c.l.s4 1966171168
    %v545 = vunpack.c.0.s8 %v544
    %v546 = vlaneseq
    %v547 = vshrl.u32 %v546, 7
    %v548 = vsub.s32 %v545, %v547
    %v549 = vrot.slane %v542, %v548
    %551 = vst [vmem:[#allocation7] sm:$0x7] %v549
    // Predicated region
    $region46: #{tpu_custom_call.1} parent=1 // pred_check
      _
    $region47: #{tpu_custom_call.1} parent=1 // pred_check_branch
      %553 = sbr.rel (0) target = $region49
    $region48: #{tpu_custom_call.1} parent=1 // pred_region
      %s555 = ssub.s32 48, 48
      %556 = vsyncadd [#allocation4], %s555
      %s558 = sshll.u32 [#allocation7], 4
      %s559 = int_to_ptr.vmem [resolvable:$true] %s558
      %561 = dma.vmem_to_hbm [thread:$0]  %s559, 48, %s9, [#allocation4]
    $region49: #{tpu_custom_call.1} parent=1 // pred_fallthru
      _
    // Predicated region
    $region50: #{tpu_custom_call.1} parent=1 // pred_check
      _
    $region51: #{tpu_custom_call.1} parent=1 // pred_check_branch
      %563 = sbr.rel (0) target = $region53
    $region52: #{tpu_custom_call.1} parent=1 // pred_region
      %s565 = ssub.s32 32, 32
      %566 = vsyncadd [#allocation9], %s565
      %s568 = sshll.u32 [#allocation8], 4
      %s569 = int_to_ptr.vmem [resolvable:$true] %s568
      %571 = dma.vmem_to_hbm [thread:$0]  %s569, 32, %s10, [#allocation9]
    $region53: #{tpu_custom_call.1} parent=1 // pred_fallthru
      _
    // Predicated region
    $region54: #{tpu_custom_call.1} parent=1 // pred_check
      _
    $region55: #{tpu_custom_call.1} parent=1 // pred_check_branch
      %573 = sbr.rel (0) target = $region57
    $region56: #{tpu_custom_call.1} parent=1 // pred_region
      %574 = dma.done [#allocation4], 48
    $region57: #{tpu_custom_call.1} parent=1 // pred_fallthru
      _
    // Predicated region
    $region58: #{tpu_custom_call.1} parent=1 // pred_check
      _
    $region59: #{tpu_custom_call.1} parent=1 // pred_check_branch
      %576 = sbr.rel (0) target = $region61
    $region60: #{tpu_custom_call.1} parent=1 // pred_region
      %577 = dma.done [#allocation9], 32
    $region61: #{tpu_custom_call.1} parent=1 // pred_fallthru
      _
    %578 = vsyncpa [#allocation3], 1
    %579 = vsyncpa [#allocation6], 1
    %580 = vsyncpa [#allocation4], 1
    %581 = vsyncpa [#allocation9], 1

</llo_original>
